<compile_context>
chip_gen: v7x
topology: tpu7x:2x2x1
jax: 0.10.0
libtpu: 0.0.40
codegen_flags: <defaults>
</compile_context>

<pallas_src>
import functools

import jax
import jax.numpy as jnp
from jax.experimental import pallas as pl
from jax.experimental.pallas import tpu as pltpu

IN_FEATURES = 28 * 28    # 784
OUT_FEATURES = 10

N_PAD = 128              # lane-dense RHS width for the MXU (weights only; tiny)
SUBLANE = 8              # f32 sublane packing


def _round_up(v, m):
    return (v + m - 1) // m * m


def _linear_kernel(x_ref, w_ref, b_ref, o_ref):
    # (TB, 784) @ (784, 128) -> (TB, 128) on the MXU, f32 accumulation.
    acc = jnp.dot(x_ref[...], w_ref[...], preferred_element_type=jnp.float32)
    # Only the first 10 columns are real; slice before the bias add so the HBM
    # writeback is a narrow (TB, 10) block instead of a 128-wide slab.
    o_ref[...] = (acc[:, :OUT_FEATURES] + b_ref[...]).astype(o_ref.dtype)


@functools.partial(jax.jit, static_argnames=("batch_tile", "compute_dtype"))
def easy_model_forward(x, w, b, *, batch_tile=1024, compute_dtype=None):
    """y = x @ w + b  (PyTorch Linear(784, 10) forward).

    x: (B, 784) float          (any leading shape is flattened to (B, 784))
    w: (784, 10) float         (PyTorch stores (10, 784); pre-transposed here)
    b: (10,) or (1, 10) float
    returns: (B, 10) float32
    """
    x = x.reshape(-1, IN_FEATURES)
    B = x.shape[0]
    Kw, N = w.shape
    b = b.reshape(1, -1)
    assert Kw == IN_FEATURES and N == OUT_FEATURES and b.shape == (1, OUT_FEATURES)

    if compute_dtype is not None:
        # bf16 operands halve x's HBM read when activations already live in bf16;
        # accumulation stays f32 (preferred_element_type) and the bias add is f32.
        x = x.astype(compute_dtype)
        w = w.astype(compute_dtype)
    b = b.astype(jnp.float32)

    # Pad only the tiny weight matrix to a lane-dense (784, 128) slab. x is untouched.
    w_p = jnp.zeros((IN_FEATURES, N_PAD), w.dtype).at[:, :OUT_FEATURES].set(w)

    # ---- batch tile selection ----
    TB = min(_round_up(batch_tile, SUBLANE), _round_up(B, SUBLANE))
    # v7x: guarantee >= 2 grid steps so both TensorCores get work (no-op on v5e/v6e).
    half = _round_up(pl.cdiv(B, 2), SUBLANE)
    if B >= 2 * SUBLANE and TB > half:
        TB = half
    if TB > B:
        # Tiny batch: use a full-extent block (exempt from the 8-row divisibility rule).
        TB = B
    grid = (pl.cdiv(B, TB),)

    return pl.pallas_call(
        _linear_kernel,
        out_shape=jax.ShapeDtypeStruct((B, OUT_FEATURES), jnp.float32),
        grid=grid,
        in_specs=[
            # Activations: unpadded K, tiled over the batch (last block may be partial).
            pl.BlockSpec((TB, IN_FEATURES), lambda i: (i, 0)),
            # Weights / bias: constant block index -> resident in VMEM across the grid.
            pl.BlockSpec((IN_FEATURES, N_PAD), lambda i: (0, 0)),
            pl.BlockSpec((1, OUT_FEATURES), lambda i: (0, 0)),
        ],
        out_specs=pl.BlockSpec((TB, OUT_FEATURES), lambda i: (i, 0)),
        compiler_params=pltpu.CompilerParams(
            dimension_semantics=("parallel",),        # batch tiles are independent
            vmem_limit_bytes=48 * 1024 * 1024,        # headroom for batch_tile up to ~4096
        ),
    )(x, w_p, b)


if __name__ == "__main__":
    key = jax.random.PRNGKey(0)
    k_x, k_w, k_b, k_x2 = jax.random.split(key, 4)

    IN, OUT = IN_FEATURES, OUT_FEATURES

    # Deterministic parameter init mimicking torch.nn.Linear's U(-1/sqrt(in), 1/sqrt(in)).
    bound = 1.0 / (IN ** 0.5)
    w = jax.random.uniform(k_w, (IN, OUT), jnp.float32, -bound, bound)   # (784, 10)
    b = jax.random.uniform(k_b, (1, OUT), jnp.float32, -bound, bound)    # (1, 10)

    # Small example: batch of 2 flattened 28x28 "images" (full-extent batch block, grid=(1,)).
    B = 2
    x = jax.random.normal(k_x, (B, IN), jnp.float32)
    y = easy_model_forward(x, w, b)
    jax.block_until_ready(y)
    y_ref = x @ w + b
    assert y.shape == (B, OUT)
    assert jnp.allclose(y, y_ref, atol=1e-5, rtol=1e-5)

    # Non-aligned batch: exercises the 2-step "parallel" grid and the masked partial
    # last block (no batch padding, no dead rows).
    B2 = 300
    x2 = jax.random.normal(k_x2, (B2, IN), jnp.float32)
    y2 = easy_model_forward(x2, w, b)
    jax.block_until_ready(y2)
    y2_ref = x2 @ w + b
    assert y2.shape == (B2, OUT)
    assert jnp.allclose(y2, y2_ref, atol=1e-5, rtol=1e-5)

    # Optional bf16-operand path (f32 accumulation) -- looser tolerance by design.
    y3 = easy_model_forward(x2, w, b, compute_dtype=jnp.bfloat16)
    jax.block_until_ready(y3)
    assert jnp.allclose(y3, y2_ref, atol=3e-2, rtol=3e-2)

    print("KERNEL_OK")
</pallas_src>

<mosaic_0001>
module attributes {stable_mosaic.version = 11 : i64} {
  func.func @_linear_kernel(%arg0: i32, %arg1: memref<2x784xf32, #tpu.memory_space<vmem>>, %arg2: memref<784x128xf32, #tpu.memory_space<vmem>>, %arg3: memref<1x10xf32, #tpu.memory_space<vmem>>, %arg4: memref<2x10xf32, #tpu.memory_space<vmem>>) attributes {dimension_semantics = [#tpu.dimension_semantics<parallel>], iteration_bounds = array<i64: 1>, scalar_prefetch = 0 : i64, scratch_operands = 0 : i64, tpu.core_type = #tpu.core_type<tc>, window_params = [{transform_indices = @transform_0, window_bounds = array<i64: 2, 784>}, {pipeline_mode = #tpu.pipeline_mode<synchronous>, transform_indices = @transform_1, window_bounds = array<i64: 784, 128>}, {pipeline_mode = #tpu.pipeline_mode<synchronous>, transform_indices = @transform_2, window_bounds = array<i64: 1, 10>}, {transform_indices = @transform_3, window_bounds = array<i64: 2, 10>}]} {
    %c0 = arith.constant 0 : index
    %c0_0 = arith.constant 0 : index
    %0 = vector.load %arg1[%c0, %c0_0] : memref<2x784xf32, #tpu.memory_space<vmem>>, vector<2x784xf32>
    %c0_1 = arith.constant 0 : index
    %c0_2 = arith.constant 0 : index
    %1 = vector.load %arg2[%c0_1, %c0_2] : memref<784x128xf32, #tpu.memory_space<vmem>>, vector<784x128xf32>
    %cst = arith.constant dense<0.000000e+00> : vector<2x128xf32>
    %2 = tpu.matmul %0, %1, %cst {dimension_numbers = #tpu.dot_dimension_numbers<[1], [0], [0], [1], [0, 0, 1, 1], [], []>} : vector<2x784xf32>, vector<784x128xf32>, vector<2x128xf32> -> vector<2x128xf32>
    %3 = vector.extract_strided_slice %2 {offsets = [0, 0], sizes = [2, 10], strides = [1, 1]} : vector<2x128xf32> to vector<2x10xf32>
    %c0_3 = arith.constant 0 : index
    %c0_4 = arith.constant 0 : index
    %4 = vector.load %arg3[%c0_3, %c0_4] : memref<1x10xf32, #tpu.memory_space<vmem>>, vector<1x10xf32>
    %5 = vector.broadcast %4 : vector<1x10xf32> to vector<2x10xf32>
    %6 = arith.addf %3, %5 : vector<2x10xf32>
    %c0_5 = arith.constant 0 : index
    %c0_6 = arith.constant 0 : index
    %7 = vector.load %arg4[%c0_5, %c0_6] : memref<2x10xf32, #tpu.memory_space<vmem>>, vector<2x10xf32>
    tpu.vector_store %arg4[%c0_5, %c0_6], %6 {strides = array<i32>} : memref<2x10xf32, #tpu.memory_space<vmem>>, vector<2x10xf32>,
    return
  }
  func.func @transform_0(%arg0: i32) -> (i32, i32) {
    %c0_i32 = arith.constant 0 : i32
    %c0_i32_0 = arith.constant 0 : i32
    return %arg0, %c0_i32 : i32, i32
  }
  func.func @transform_1(%arg0: i32) -> (i32, i32) {
    %c0_i32 = arith.constant 0 : i32
    %c0_i32_0 = arith.constant 0 : i32
    %c0_i32_1 = arith.constant 0 : i32
    return %c0_i32, %c0_i32_0 : i32, i32
  }
  func.func @transform_2(%arg0: i32) -> (i32, i32) {
    %c0_i32 = arith.constant 0 : i32
    %c0_i32_0 = arith.constant 0 : i32
    %c0_i32_1 = arith.constant 0 : i32
    return %c0_i32, %c0_i32_0 : i32, i32
  }
  func.func @transform_3(%arg0: i32) -> (i32, i32) {
    %c0_i32 = arith.constant 0 : i32
    %c0_i32_0 = arith.constant 0 : i32
    return %arg0, %c0_i32 : i32, i32
  }
}

</mosaic_0001>

<llo_original>
// kernel: easy_model_forward.1
$region0: #{easy_model_forward.1}
  #allocation0 [shape = 'u32[]', space=smem, size = 0x4, offset = 0x4, fixed_abs, tag = 'smem constant byte address 0x4 - core index']
  #allocation1 [shape = 'u32[144,128]{1,0:T(1,128)}', space=vmem, size = 0x12000, scoped, tag = 'internal scratch']
  %s0 = inlined_call_operand.vmem [shape: f32[2,784], index: 0, kind: input, shape index: {}]
  %s1 = inlined_call_operand.vmem [shape: f32[784,128], index: 1, kind: input, shape index: {}]
  %s2 = inlined_call_operand.vmem [shape: f32[1,10], index: 2, kind: input, shape index: {}]
  %s3 = inlined_call_operand.hbm [shape: f32[2,10], index: 3, kind: output, shape index: {}]
  %s4 = sld [smem:[#allocation0]]
  $region22: #{easy_model_forward.1} parent=0
    _
  %s6 = ssub.s32 1, %s4
  %s7 = scalar_select 0, %s6, %s4
  $region1: #{easy_model_forward.1} parent=0
    #allocation2 [shape = 'u8[1024]{0}', space=vmem, size = 0x400, scoped, tag = 'output window, operand 0, single buffered']
    #allocation3 [shape = 's32[1]{0}', space=sflag, size = 0x4, scoped, tag = 'scoped memory for easy_model_forward.1']
    %8 = vsyncpa [#allocation3], 0
    // Predicated region
    $region2: #{easy_model_forward.1} parent=1 // pred_check
      _
    $region3: #{easy_model_forward.1} parent=1 // pred_check_branch
      %10 = sbr.rel (0) target = $region5
    $region4: #{easy_model_forward.1} parent=1 // pred_region
      _
    $region5: #{easy_model_forward.1} parent=1 // pred_fallthru
      _
    // Predicated region
    $region6: #{easy_model_forward.1} parent=1 // pred_check
      _
    $region7: #{easy_model_forward.1} parent=1 // pred_check_branch
      %12 = sbr.rel (0) target = $region9
    $region8: #{easy_model_forward.1} parent=1 // pred_region
      _
    $region9: #{easy_model_forward.1} parent=1 // pred_fallthru
      _
    // Predicated region
    $region10: #{easy_model_forward.1} parent=1 // pred_check
      _
    $region11: #{easy_model_forward.1} parent=1 // pred_check_branch
      %14 = sbr.rel (0) target = $region13
    $region12: #{easy_model_forward.1} parent=1 // pred_region
      _
    $region13: #{easy_model_forward.1} parent=1 // pred_fallthru
      _
    %v15 = vld [vmem:[%s0] sm:$0xff]
    %v16 = vld [vmem:[%s0 + $0x8] sm:$0x3f]
    %v17 = vld [vmem:[%s1] sm:$0xff]
    %v18 = vld [vmem:[%s1 + $0x8] sm:$0xff]
    %v19 = vld [vmem:[%s1 + $0x10] sm:$0xff]
    %v20 = vld [vmem:[%s1 + $0x18] sm:$0xff]
    %v21 = vld [vmem:[%s1 + $0x20] sm:$0xff]
    %v22 = vld [vmem:[%s1 + $0x28] sm:$0xff]
    %v23 = vld [vmem:[%s1 + $0x30] sm:$0xff]
    %v24 = vld [vmem:[%s1 + $0x38] sm:$0xff]
    %v25 = vld [vmem:[%s1 + $0x40] sm:$0xff]
    %v26 = vld [vmem:[%s1 + $0x48] sm:$0xff]
    %v27 = vld [vmem:[%s1 + $0x50] sm:$0xff]
    %v28 = vld [vmem:[%s1 + $0x58] sm:$0xff]
    %v29 = vld [vmem:[%s1 + $0x60] sm:$0xff]
    %v30 = vld [vmem:[%s1 + $0x68] sm:$0xff]
    %v31 = vld [vmem:[%s1 + $0x70] sm:$0xff]
    %v32 = vld [vmem:[%s1 + $0x78] sm:$0xff]
    %v33 = vld [vmem:[%s1 + $0x80] sm:$0xff]
    %v34 = vld [vmem:[%s1 + $0x88] sm:$0xff]
    %v35 = vld [vmem:[%s1 + $0x90] sm:$0xff]
    %v36 = vld [vmem:[%s1 + $0x98] sm:$0xff]
    %v37 = vld [vmem:[%s1 + $0xa0] sm:$0xff]
    %v38 = vld [vmem:[%s1 + $0xa8] sm:$0xff]
    %v39 = vld [vmem:[%s1 + $0xb0] sm:$0xff]
    %v40 = vld [vmem:[%s1 + $0xb8] sm:$0xff]
    %v41 = vld [vmem:[%s1 + $0xc0] sm:$0xff]
    %v42 = vld [vmem:[%s1 + $0xc8] sm:$0xff]
    %v43 = vld [vmem:[%s1 + $0xd0] sm:$0xff]
    %v44 = vld [vmem:[%s1 + $0xd8] sm:$0xff]
    %v45 = vld [vmem:[%s1 + $0xe0] sm:$0xff]
    %v46 = vld [vmem:[%s1 + $0xe8] sm:$0xff]
    %v47 = vld [vmem:[%s1 + $0xf0] sm:$0xff]
    %v48 = vld [vmem:[%s1 + $0xf8] sm:$0xff]
    %v49 = vld [vmem:[%s1 + $0x100] sm:$0xff]
    %v50 = vld [vmem:[%s1 + $0x108] sm:$0xff]
    %v51 = vld [vmem:[%s1 + $0x110] sm:$0xff]
    %v52 = vld [vmem:[%s1 + $0x118] sm:$0xff]
    %v53 = vld [vmem:[%s1 + $0x120] sm:$0xff]
    %v54 = vld [vmem:[%s1 + $0x128] sm:$0xff]
    %v55 = vld [vmem:[%s1 + $0x130] sm:$0xff]
    %v56 = vld [vmem:[%s1 + $0x138] sm:$0xff]
    %v57 = vld [vmem:[%s1 + $0x140] sm:$0xff]
    %v58 = vld [vmem:[%s1 + $0x148] sm:$0xff]
    %v59 = vld [vmem:[%s1 + $0x150] sm:$0xff]
    %v60 = vld [vmem:[%s1 + $0x158] sm:$0xff]
    %v61 = vld [vmem:[%s1 + $0x160] sm:$0xff]
    %v62 = vld [vmem:[%s1 + $0x168] sm:$0xff]
    %v63 = vld [vmem:[%s1 + $0x170] sm:$0xff]
    %v64 = vld [vmem:[%s1 + $0x178] sm:$0xff]
    %v65 = vld [vmem:[%s1 + $0x180] sm:$0xff]
    %v66 = vld [vmem:[%s1 + $0x188] sm:$0xff]
    %v67 = vld [vmem:[%s1 + $0x190] sm:$0xff]
    %v68 = vld [vmem:[%s1 + $0x198] sm:$0xff]
    %v69 = vld [vmem:[%s1 + $0x1a0] sm:$0xff]
    %v70 = vld [vmem:[%s1 + $0x1a8] sm:$0xff]
    %v71 = vld [vmem:[%s1 + $0x1b0] sm:$0xff]
    %v72 = vld [vmem:[%s1 + $0x1b8] sm:$0xff]
    %v73 = vld [vmem:[%s1 + $0x1c0] sm:$0xff]
    %v74 = vld [vmem:[%s1 + $0x1c8] sm:$0xff]
    %v75 = vld [vmem:[%s1 + $0x1d0] sm:$0xff]
    %v76 = vld [vmem:[%s1 + $0x1d8] sm:$0xff]
    %v77 = vld [vmem:[%s1 + $0x1e0] sm:$0xff]
    %v78 = vld [vmem:[%s1 + $0x1e8] sm:$0xff]
    %v79 = vld [vmem:[%s1 + $0x1f0] sm:$0xff]
    %v80 = vld [vmem:[%s1 + $0x1f8] sm:$0xff]
    %v81 = vld [vmem:[%s1 + $0x200] sm:$0xff]
    %v82 = vld [vmem:[%s1 + $0x208] sm:$0xff]
    %v83 = vld [vmem:[%s1 + $0x210] sm:$0xff]
    %v84 = vld [vmem:[%s1 + $0x218] sm:$0xff]
    %v85 = vld [vmem:[%s1 + $0x220] sm:$0xff]
    %v86 = vld [vmem:[%s1 + $0x228] sm:$0xff]
    %v87 = vld [vmem:[%s1 + $0x230] sm:$0xff]
    %v88 = vld [vmem:[%s1 + $0x238] sm:$0xff]
    %v89 = vld [vmem:[%s1 + $0x240] sm:$0xff]
    %v90 = vld [vmem:[%s1 + $0x248] sm:$0xff]
    %v91 = vld [vmem:[%s1 + $0x250] sm:$0xff]
    %v92 = vld [vmem:[%s1 + $0x258] sm:$0xff]
    %v93 = vld [vmem:[%s1 + $0x260] sm:$0xff]
    %v94 = vld [vmem:[%s1 + $0x268] sm:$0xff]
    %v95 = vld [vmem:[%s1 + $0x270] sm:$0xff]
    %v96 = vld [vmem:[%s1 + $0x278] sm:$0xff]
    %v97 = vld [vmem:[%s1 + $0x280] sm:$0xff]
    %v98 = vld [vmem:[%s1 + $0x288] sm:$0xff]
    %v99 = vld [vmem:[%s1 + $0x290] sm:$0xff]
    %v100 = vld [vmem:[%s1 + $0x298] sm:$0xff]
    %v101 = vld [vmem:[%s1 + $0x2a0] sm:$0xff]
    %v102 = vld [vmem:[%s1 + $0x2a8] sm:$0xff]
    %v103 = vld [vmem:[%s1 + $0x2b0] sm:$0xff]
    %v104 = vld [vmem:[%s1 + $0x2b8] sm:$0xff]
    %v105 = vld [vmem:[%s1 + $0x2c0] sm:$0xff]
    %v106 = vld [vmem:[%s1 + $0x2c8] sm:$0xff]
    %v107 = vld [vmem:[%s1 + $0x2d0] sm:$0xff]
    %v108 = vld [vmem:[%s1 + $0x2d8] sm:$0xff]
    %v109 = vld [vmem:[%s1 + $0x2e0] sm:$0xff]
    %v110 = vld [vmem:[%s1 + $0x2e8] sm:$0xff]
    %v111 = vld [vmem:[%s1 + $0x2f0] sm:$0xff]
    %v112 = vld [vmem:[%s1 + $0x2f8] sm:$0xff]
    %v113 = vld [vmem:[%s1 + $0x300] sm:$0xff]
    %v114 = vld [vmem:[%s1 + $0x308] sm:$0xff]
    %v117 = vcombine.high %v15, %v15
    %v119 = vunpack.c.l.s4 1983009808
    %v120 = vunpack.c.0.s8 %v119
    %v121 = vlaneseq
    %v122 = vshrl.u32 %v121, 7
    %v123 = vsub.s32 %v120, %v122
    %v124 = vrot.slane %v15, %v123
    %v126 = vunpack.c.l.s4 1983009808
    %v127 = vunpack.c.0.s8 %v126
    %v128 = vlaneseq
    %v129 = vshrl.u32 %v128, 7
    %v130 = vsub.s32 %v127, %v129
    %v131 = vrot.slane %v117, %v130
    %v132 = vcombine.high %v124, %v124
    %v133 = vcombine.high %v131, %v131
    %v134 = vcombine.high %v16, %v16
    %v136 = vunpack.c.l.s4 1983009808
    %v137 = vunpack.c.0.s8 %v136
    %v138 = vlaneseq
    %v139 = vshrl.u32 %v138, 7
    %v140 = vsub.s32 %v137, %v139
    %v141 = vrot.slane %v16, %v140
    %v143 = vunpack.c.l.s4 1983009808
    %v144 = vunpack.c.0.s8 %v143
    %v145 = vlaneseq
    %v146 = vshrl.u32 %v145, 7
    %v147 = vsub.s32 %v144, %v146
    %v148 = vrot.slane %v134, %v147
    %v149 = vcombine.high %v141, %v141
    %vm156 = vcmask 130048
    %v157 = vsel %vm156, %v148, 0
    %159 = vmatprep.subr.mxu0 0.0
    %160 = vmatpush1.msra.mxu0 %v17
    %161 = vmatprep.subr.mxu0 0.0
    %162 = vmatpush1.msra.mxu0 %v18
    %163 = vmatprep.subr.mxu0 0.0
    %164 = vmatpush1.msra.mxu0 %v19
    %165 = vmatprep.subr.mxu0 0.0
    %166 = vmatpush1.msra.mxu0 %v20
    %167 = vmatprep.subr.mxu0 0.0
    %168 = vmatpush1.msra.mxu0 %v21
    %169 = vmatprep.subr.mxu0 0.0
    %170 = vmatpush1.msra.mxu0 %v22
    %171 = vmatprep.subr.mxu0 0.0
    %172 = vmatpush1.msra.mxu0 %v23
    %173 = vmatprep.subr.mxu0 0.0
    %174 = vmatpush1.msra.mxu0 %v24
    %175 = vmatprep.subr.mxu0 0.0
    %176 = vmatpush1.msra.mxu0 %v25
    %177 = vmatprep.subr.mxu0 0.0
    %178 = vmatpush1.msra.mxu0 %v26
    %179 = vmatprep.subr.mxu0 0.0
    %180 = vmatpush1.msra.mxu0 %v27
    %181 = vmatprep.subr.mxu0 0.0
    %182 = vmatpush1.msra.mxu0 %v28
    %183 = vmatprep.subr.mxu0 0.0
    %184 = vmatpush1.msra.mxu0 %v29
    %185 = vmatprep.subr.mxu0 0.0
    %186 = vmatpush1.msra.mxu0 %v30
    %187 = vmatprep.subr.mxu0 0.0
    %188 = vmatpush1.msra.mxu0 %v31
    %189 = vmatprep.subr.mxu0 0.0
    %190 = vmatpush1.msra.mxu0 %v32
    %191 = vmatprep.subr.mxu0 0.0
    %192 = vmatpush1.msra.mxu0 %v33
    %193 = vmatprep.subr.mxu0 0.0
    %194 = vmatpush1.msra.mxu0 %v34
    %195 = vmatprep.subr.mxu0 0.0
    %196 = vmatpush1.msra.mxu0 %v35
    %197 = vmatprep.subr.mxu0 0.0
    %198 = vmatpush1.msra.mxu0 %v36
    %199 = vmatprep.subr.mxu0 0.0
    %200 = vmatpush1.msra.mxu0 %v37
    %201 = vmatprep.subr.mxu0 0.0
    %202 = vmatpush1.msra.mxu0 %v38
    %203 = vmatprep.subr.mxu0 0.0
    %204 = vmatpush1.msra.mxu0 %v39
    %205 = vmatprep.subr.mxu0 0.0
    %206 = vmatpush1.msra.mxu0 %v40
    %207 = vmatprep.subr.mxu0 0.0
    %208 = vmatpush1.msra.mxu0 %v41
    %209 = vmatprep.subr.mxu0 0.0
    %210 = vmatpush1.msra.mxu0 %v42
    %211 = vmatprep.subr.mxu0 0.0
    %212 = vmatpush1.msra.mxu0 %v43
    %213 = vmatprep.subr.mxu0 0.0
    %214 = vmatpush1.msra.mxu0 %v44
    %215 = vmatprep.subr.mxu0 0.0
    %216 = vmatpush1.msra.mxu0 %v45
    %217 = vmatprep.subr.mxu0 0.0
    %218 = vmatpush1.msra.mxu0 %v46
    %219 = vmatprep.subr.mxu0 0.0
    %220 = vmatpush1.msra.mxu0 %v47
    %221 = vmatprep.subr.mxu0 0.0
    %222 = vmatpush1.msra.mxu0 %v48
    %223 = vmatprep.mubr.f32.mxu0 %v132
    %224 = vmatmul.mubr.f32.gmra.mrb[0].mxu0 %v124
    %v225 = vpop.f32.mrb[0].mxu0
    %v226 = vadd.f32 0.0, %v225
    %v227 = vpop.f32.mrb[0].mxu0
    %228 = vdwg.mxu0
    %229 = vmatprep.subr.mxu0 0.0
    %230 = vmatpush1.msra.mxu0 %v49
    %231 = vmatprep.subr.mxu0 0.0
    %232 = vmatpush1.msra.mxu0 %v50
    %233 = vmatprep.subr.mxu0 0.0
    %234 = vmatpush1.msra.mxu0 %v51
    %235 = vmatprep.subr.mxu0 0.0
    %236 = vmatpush1.msra.mxu0 %v52
    %237 = vmatprep.subr.mxu0 0.0
    %238 = vmatpush1.msra.mxu0 %v53
    %239 = vmatprep.subr.mxu0 0.0
    %240 = vmatpush1.msra.mxu0 %v54
    %241 = vmatprep.subr.mxu0 0.0
    %242 = vmatpush1.msra.mxu0 %v55
    %243 = vmatprep.subr.mxu0 0.0
    %244 = vmatpush1.msra.mxu0 %v56
    %245 = vmatprep.subr.mxu0 0.0
    %246 = vmatpush1.msra.mxu0 %v57
    %247 = vmatprep.subr.mxu0 0.0
    %248 = vmatpush1.msra.mxu0 %v58
    %249 = vmatprep.subr.mxu0 0.0
    %250 = vmatpush1.msra.mxu0 %v59
    %251 = vmatprep.subr.mxu0 0.0
    %252 = vmatpush1.msra.mxu0 %v60
    %253 = vmatprep.subr.mxu0 0.0
    %254 = vmatpush1.msra.mxu0 %v61
    %255 = vmatprep.subr.mxu0 0.0
    %256 = vmatpush1.msra.mxu0 %v62
    %257 = vmatprep.subr.mxu0 0.0
    %258 = vmatpush1.msra.mxu0 %v63
    %259 = vmatprep.subr.mxu0 0.0
    %260 = vmatpush1.msra.mxu0 %v64
    %261 = vmatprep.subr.mxu0 0.0
    %262 = vmatpush1.msra.mxu0 %v65
    %263 = vmatprep.subr.mxu0 0.0
    %264 = vmatpush1.msra.mxu0 %v66
    %265 = vmatprep.subr.mxu0 0.0
    %266 = vmatpush1.msra.mxu0 %v67
    %267 = vmatprep.subr.mxu0 0.0
    %268 = vmatpush1.msra.mxu0 %v68
    %269 = vmatprep.subr.mxu0 0.0
    %270 = vmatpush1.msra.mxu0 %v69
    %271 = vmatprep.subr.mxu0 0.0
    %272 = vmatpush1.msra.mxu0 %v70
    %273 = vmatprep.subr.mxu0 0.0
    %274 = vmatpush1.msra.mxu0 %v71
    %275 = vmatprep.subr.mxu0 0.0
    %276 = vmatpush1.msra.mxu0 %v72
    %277 = vmatprep.subr.mxu0 0.0
    %278 = vmatpush1.msra.mxu0 %v73
    %279 = vmatprep.subr.mxu0 0.0
    %280 = vmatpush1.msra.mxu0 %v74
    %281 = vmatprep.subr.mxu0 0.0
    %282 = vmatpush1.msra.mxu0 %v75
    %283 = vmatprep.subr.mxu0 0.0
    %284 = vmatpush1.msra.mxu0 %v76
    %285 = vmatprep.subr.mxu0 0.0
    %286 = vmatpush1.msra.mxu0 %v77
    %287 = vmatprep.subr.mxu0 0.0
    %288 = vmatpush1.msra.mxu0 %v78
    %289 = vmatprep.subr.mxu0 0.0
    %290 = vmatpush1.msra.mxu0 %v79
    %291 = vmatprep.subr.mxu0 0.0
    %292 = vmatpush1.msra.mxu0 %v80
    %293 = vmatprep.mubr.f32.mxu0 %v133
    %294 = vmatmul.mubr.f32.gmra.mrb[0].mxu0 %v131
    %v295 = vpop.f32.mrb[0].mxu0
    %v296 = vadd.f32 %v226, %v295
    %v297 = vpop.f32.mrb[0].mxu0
    %298 = vdwg.mxu0
    %299 = vmatprep.subr.mxu0 0.0
    %300 = vmatpush1.msra.mxu0 %v81
    %301 = vmatprep.subr.mxu0 0.0
    %302 = vmatpush1.msra.mxu0 %v82
    %303 = vmatprep.subr.mxu0 0.0
    %304 = vmatpush1.msra.mxu0 %v83
    %305 = vmatprep.subr.mxu0 0.0
    %306 = vmatpush1.msra.mxu0 %v84
    %307 = vmatprep.subr.mxu0 0.0
    %308 = vmatpush1.msra.mxu0 %v85
    %309 = vmatprep.subr.mxu0 0.0
    %310 = vmatpush1.msra.mxu0 %v86
    %311 = vmatprep.subr.mxu0 0.0
    %312 = vmatpush1.msra.mxu0 %v87
    %313 = vmatprep.subr.mxu0 0.0
    %314 = vmatpush1.msra.mxu0 %v88
    %315 = vmatprep.subr.mxu0 0.0
    %316 = vmatpush1.msra.mxu0 %v89
    %317 = vmatprep.subr.mxu0 0.0
    %318 = vmatpush1.msra.mxu0 %v90
    %319 = vmatprep.subr.mxu0 0.0
    %320 = vmatpush1.msra.mxu0 %v91
    %321 = vmatprep.subr.mxu0 0.0
    %322 = vmatpush1.msra.mxu0 %v92
    %323 = vmatprep.subr.mxu0 0.0
    %324 = vmatpush1.msra.mxu0 %v93
    %325 = vmatprep.subr.mxu0 0.0
    %326 = vmatpush1.msra.mxu0 %v94
    %327 = vmatprep.subr.mxu0 0.0
    %328 = vmatpush1.msra.mxu0 %v95
    %329 = vmatprep.subr.mxu0 0.0
    %330 = vmatpush1.msra.mxu0 %v96
    %331 = vmatprep.subr.mxu0 0.0
    %332 = vmatpush1.msra.mxu0 %v97
    %333 = vmatprep.subr.mxu0 0.0
    %334 = vmatpush1.msra.mxu0 %v98
    %335 = vmatprep.subr.mxu0 0.0
    %336 = vmatpush1.msra.mxu0 %v99
    %337 = vmatprep.subr.mxu0 0.0
    %338 = vmatpush1.msra.mxu0 %v100
    %339 = vmatprep.subr.mxu0 0.0
    %340 = vmatpush1.msra.mxu0 %v101
    %341 = vmatprep.subr.mxu0 0.0
    %342 = vmatpush1.msra.mxu0 %v102
    %343 = vmatprep.subr.mxu0 0.0
    %344 = vmatpush1.msra.mxu0 %v103
    %345 = vmatprep.subr.mxu0 0.0
    %346 = vmatpush1.msra.mxu0 %v104
    %347 = vmatprep.subr.mxu0 0.0
    %348 = vmatpush1.msra.mxu0 %v105
    %349 = vmatprep.subr.mxu0 0.0
    %350 = vmatpush1.msra.mxu0 %v106
    %351 = vmatprep.subr.mxu0 0.0
    %352 = vmatpush1.msra.mxu0 %v107
    %353 = vmatprep.subr.mxu0 0.0
    %354 = vmatpush1.msra.mxu0 %v108
    %355 = vmatprep.subr.mxu0 0.0
    %356 = vmatpush1.msra.mxu0 %v109
    %357 = vmatprep.subr.mxu0 0.0
    %358 = vmatpush1.msra.mxu0 %v110
    %359 = vmatprep.subr.mxu0 0.0
    %360 = vmatpush1.msra.mxu0 %v111
    %361 = vmatprep.subr.mxu0 0.0
    %362 = vmatpush1.msra.mxu0 %v112
    %363 = vmatprep.mubr.f32.mxu0 %v149
    %364 = vmatmul.mubr.f32.gmra.mrb[0].mxu0 %v141
    %v365 = vpop.f32.mrb[0].mxu0
    %v366 = vadd.f32 %v296, %v365
    %v367 = vpop.f32.mrb[0].mxu0
    %368 = vdwg.mxu0
    %369 = vmatprep.subr.mxu0 0.0
    %370 = vmatpush1.msra.mxu0 %v113
    %371 = vmatprep.subr.mxu0 0.0
    %372 = vmatpush1.msra.mxu0 %v114
    %373 = vmatprep.subr.mxu0 0.0
    %374 = vmatpush1.msra.mxu0 0.0
    %375 = vmatprep.subr.mxu0 0.0
    %376 = vmatpush1.msra.mxu0 0.0
    %377 = vmatprep.subr.mxu0 0.0
    %378 = vmatpush1.msra.mxu0 0.0
    %379 = vmatprep.subr.mxu0 0.0
    %380 = vmatpush1.msra.mxu0 0.0
    %381 = vmatprep.subr.mxu0 0.0
    %382 = vmatpush1.msra.mxu0 0.0
    %383 = vmatprep.subr.mxu0 0.0
    %384 = vmatpush1.msra.mxu0 0.0
    %385 = vmatprep.subr.mxu0 0.0
    %386 = vmatpush1.msra.mxu0 0.0
    %387 = vmatprep.subr.mxu0 0.0
    %388 = vmatpush1.msra.mxu0 0.0
    %389 = vmatprep.subr.mxu0 0.0
    %390 = vmatpush1.msra.mxu0 0.0
    %391 = vmatprep.subr.mxu0 0.0
    %392 = vmatpush1.msra.mxu0 0.0
    %393 = vmatprep.subr.mxu0 0.0
    %394 = vmatpush1.msra.mxu0 0.0
    %395 = vmatprep.subr.mxu0 0.0
    %396 = vmatpush1.msra.mxu0 0.0
    %397 = vmatprep.subr.mxu0 0.0
    %398 = vmatpush1.msra.mxu0 0.0
    %399 = vmatprep.subr.mxu0 0.0
    %400 = vmatpush1.msra.mxu0 0.0
    %401 = vmatprep.subr.mxu0 0.0
    %402 = vmatpush1.msra.mxu0 0.0
    %403 = vmatprep.subr.mxu0 0.0
    %404 = vmatpush1.msra.mxu0 0.0
    %405 = vmatprep.subr.mxu0 0.0
    %406 = vmatpush1.msra.mxu0 0.0
    %407 = vmatprep.subr.mxu0 0.0
    %408 = vmatpush1.msra.mxu0 0.0
    %409 = vmatprep.subr.mxu0 0.0
    %410 = vmatpush1.msra.mxu0 0.0
    %411 = vmatprep.subr.mxu0 0.0
    %412 = vmatpush1.msra.mxu0 0.0
    %413 = vmatprep.subr.mxu0 0.0
    %414 = vmatpush1.msra.mxu0 0.0
    %415 = vmatprep.subr.mxu0 0.0
    %416 = vmatpush1.msra.mxu0 0.0
    %417 = vmatprep.subr.mxu0 0.0
    %418 = vmatpush1.msra.mxu0 0.0
    %419 = vmatprep.subr.mxu0 0.0
    %420 = vmatpush1.msra.mxu0 0.0
    %421 = vmatprep.subr.mxu0 0.0
    %422 = vmatpush1.msra.mxu0 0.0
    %423 = vmatprep.subr.mxu0 0.0
    %424 = vmatpush1.msra.mxu0 0.0
    %425 = vmatprep.subr.mxu0 0.0
    %426 = vmatpush1.msra.mxu0 0.0
    %427 = vmatprep.subr.mxu0 0.0
    %428 = vmatpush1.msra.mxu0 0.0
    %429 = vmatprep.subr.mxu0 0.0
    %430 = vmatpush1.msra.mxu0 0.0
    %431 = vmatprep.subr.mxu0 0.0
    %432 = vmatpush1.msra.mxu0 0.0
    %433 = vmatprep.mubr.f32.mxu0 0.0
    %434 = vmatmul.mubr.f32.gmra.mrb[0].mxu0 %v157
    %v435 = vpop.f32.mrb[0].mxu0
    %v436 = vadd.f32 %v366, %v435
    %v437 = vpop.f32.mrb[0].mxu0
    %438 = vdwg.mxu0
    %v439 = vld [vmem:[%s2] sm:$0x1]
    %v441 = vlaneseq
    %v442 = vshrl.u32 %v441, 7
    %v443 = vsub.s32 0, %v442
    %v444 = vrot.slane %v439, %v443
    %v446 = vadd.f32 %v436, %v444
    %vm447 = vcmask 74752
    %448 = vst.msk [vmem:[#allocation2] sm:$0x3] %vm447, %v446
    // Predicated region
    $region14: #{easy_model_forward.1} parent=1 // pred_check
      _
    $region15: #{easy_model_forward.1} parent=1 // pred_check_branch
      %450 = sbr.rel (0) target = $region17
    $region16: #{easy_model_forward.1} parent=1 // pred_region
      %s452 = ssub.s32 32, 32
      %453 = vsyncadd [#allocation3], %s452
      %s455 = sshll.u32 [#allocation2], 4
      %s456 = int_to_ptr.vmem [resolvable:$true] %s455
      %458 = dma.vmem_to_hbm [thread:$0]  %s456, 32, %s3, [#allocation3]
    $region17: #{easy_model_forward.1} parent=1 // pred_fallthru
      _
    // Predicated region
    $region18: #{easy_model_forward.1} parent=1 // pred_check
      _
    $region19: #{easy_model_forward.1} parent=1 // pred_check_branch
      %460 = sbr.rel (0) target = $region21
    $region20: #{easy_model_forward.1} parent=1 // pred_region
      %461 = dma.done [#allocation3], 32
    $region21: #{easy_model_forward.1} parent=1 // pred_fallthru
      _
    %462 = vsyncpa [#allocation3], 1

</llo_original>
